<compile_context>
chip_gen: v7x
topology: tpu7x:2x2x1
jax: 0.10.0
libtpu: 0.0.40
codegen_flags: <defaults>
</compile_context>

<pallas_src>
import functools

import jax
import jax.numpy as jnp
from jax.experimental import pallas as pl
from jax.experimental.pallas import tpu as pltpu


def _bi_interaction_kernel(x_ref, o_ref, *, num_fields, embed_dim):
    # x_ref: (tb, F*D) lane-dense input slab ; o_ref: (tb, D) lane-dense output.
    x = x_ref[...].astype(jnp.float32)
    tb = o_ref.shape[0]
    acc_sum = jnp.zeros((tb, embed_dim), jnp.float32)
    acc_sq = jnp.zeros((tb, embed_dim), jnp.float32)
    # Unrolled accumulation over the (small, static) field axis: pure VPU work;
    # the lane-slice extraction rides in XLU/VPU slack under the HBM roofline.
    for f in range(num_fields):
        xf = x[:, f * embed_dim:(f + 1) * embed_dim]
        acc_sum = acc_sum + xf
        acc_sq = acc_sq + xf * xf
    o_ref[...] = (0.5 * (acc_sum * acc_sum - acc_sq)).astype(o_ref.dtype)


def _pick_batch_tile(batch, row_bytes, *, target_block_bytes=4 << 20):
    """~target-sized input blocks, sublane-aligned, and >= 2 grid steps when possible."""
    tb = max(1, target_block_bytes // max(1, row_bytes))
    tb = min(tb, batch)
    # Prefer at least 2 grid steps (software pipelining; v7x dual-TC sharding).
    if batch >= 16 and tb > batch // 2:
        tb = batch // 2
    # Sublane-align the batch tile when possible.
    if tb >= 8:
        tb -= tb % 8
    return max(1, tb)


def bi_interaction_pooling(x, *, batch_tile=None):
    """Pallas TPU implementation of BiInteractionPooling.forward.

    x: (B, F, D) array. Returns (B, 1, D), matching torch's keepdim=True.
    """
    B, F, D = x.shape
    in_bytes = x.dtype.itemsize
    out_dtype = x.dtype
    out_bytes = jnp.dtype(out_dtype).itemsize
    row_bytes = F * D * in_bytes

    tb = batch_tile if batch_tile is not None else _pick_batch_tile(B, row_bytes)
    tb = min(tb, B)
    grid = (pl.cdiv(B, tb),)

    # Free row-major view: lane-dense 2D input slab.
    x2d = x.reshape(B, F * D)

    # Size the VMEM limit to the actual double-buffered working set, with slack.
    in_block = tb * F * D * in_bytes
    out_block = tb * D * out_bytes
    vmem_working_set = 2 * in_block + 2 * out_block
    vmem_limit = min(max(2 * vmem_working_set + (4 << 20), 16 << 20), 48 << 20)

    kernel = functools.partial(_bi_interaction_kernel, num_fields=F, embed_dim=D)

    out2d = pl.pallas_call(
        kernel,
        out_shape=jax.ShapeDtypeStruct((B, D), out_dtype),
        grid_spec=pltpu.PrefetchScalarGridSpec(
            num_scalar_prefetch=0,
            grid=grid,
            in_specs=[pl.BlockSpec((tb, F * D), lambda i: (i, 0))],
            out_specs=pl.BlockSpec((tb, D), lambda i: (i, 0)),
        ),
        compiler_params=pltpu.CompilerParams(
            dimension_semantics=("parallel",),
            vmem_limit_bytes=vmem_limit,
        ),
        cost_estimate=pl.CostEstimate(
            flops=3 * B * F * D,
            transcendentals=0,
            bytes_accessed=B * F * D * in_bytes + B * D * out_bytes,
        ),
    )(x2d)

    # Restore the keepdim axis outside the kernel (free layout plumbing).
    return out2d.reshape(B, 1, D)


if __name__ == "__main__":
    # BiInteractionPooling has no parameters; deterministic input only.
    key = jax.random.PRNGKey(0)
    B, F, D = 64, 8, 32          # batch, fields, embedding dim (small demo shape)
    x = jax.random.normal(key, (B, F, D), dtype=jnp.float32)

    out = bi_interaction_pooling(x)   # auto tile -> tb=32, grid=(2,)
    out = jax.block_until_ready(out)

    # Pure-JAX reference (mirrors the PyTorch forward exactly).
    square_of_sum = jnp.square(jnp.sum(x, axis=1, keepdims=True))
    sum_of_square = jnp.sum(x * x, axis=1, keepdims=True)
    ref = 0.5 * (square_of_sum - sum_of_square)

    assert out.shape == (B, 1, D), out.shape
    assert jnp.allclose(out, ref, atol=1e-5, rtol=1e-5), float(
        jnp.max(jnp.abs(out - ref))
    )
    print("KERNEL_OK")
</pallas_src>

<mosaic_0001>
module attributes {stable_mosaic.version = 11 : i64} {
  func.func @_bi_interaction_kernel(%arg0: i32, %arg1: memref<32x256xf32, #tpu.memory_space<vmem>>, %arg2: memref<32x32xf32, #tpu.memory_space<vmem>>) attributes {dimension_semantics = [#tpu.dimension_semantics<parallel>], iteration_bounds = array<i64: 2>, scalar_prefetch = 0 : i64, scratch_operands = 0 : i64, tpu.core_type = #tpu.core_type<tc>, window_params = [{transform_indices = @transform_0, window_bounds = array<i64: 32, 256>}, {transform_indices = @transform_1, window_bounds = array<i64: 32, 32>}]} {
    %c0 = arith.constant 0 : index
    %c0_0 = arith.constant 0 : index
    %0 = vector.load %arg1[%c0, %c0_0] : memref<32x256xf32, #tpu.memory_space<vmem>>, vector<32x256xf32>
    %cst = arith.constant 0.000000e+00 : f32
    %1 = vector.broadcast %cst : f32 to vector<32x32xf32>
    %cst_1 = arith.constant 0.000000e+00 : f32
    %2 = vector.broadcast %cst_1 : f32 to vector<32x32xf32>
    %3 = vector.extract_strided_slice %0 {offsets = [0, 0], sizes = [32, 32], strides = [1, 1]} : vector<32x256xf32> to vector<32x32xf32>
    %4 = arith.addf %1, %3 : vector<32x32xf32>
    %5 = arith.mulf %3, %3 : vector<32x32xf32>
    %6 = arith.addf %2, %5 : vector<32x32xf32>
    %7 = vector.extract_strided_slice %0 {offsets = [0, 32], sizes = [32, 32], strides = [1, 1]} : vector<32x256xf32> to vector<32x32xf32>
    %8 = arith.addf %4, %7 : vector<32x32xf32>
    %9 = arith.mulf %7, %7 : vector<32x32xf32>
    %10 = arith.addf %6, %9 : vector<32x32xf32>
    %11 = vector.extract_strided_slice %0 {offsets = [0, 64], sizes = [32, 32], strides = [1, 1]} : vector<32x256xf32> to vector<32x32xf32>
    %12 = arith.addf %8, %11 : vector<32x32xf32>
    %13 = arith.mulf %11, %11 : vector<32x32xf32>
    %14 = arith.addf %10, %13 : vector<32x32xf32>
    %15 = vector.extract_strided_slice %0 {offsets = [0, 96], sizes = [32, 32], strides = [1, 1]} : vector<32x256xf32> to vector<32x32xf32>
    %16 = arith.addf %12, %15 : vector<32x32xf32>
    %17 = arith.mulf %15, %15 : vector<32x32xf32>
    %18 = arith.addf %14, %17 : vector<32x32xf32>
    %19 = vector.extract_strided_slice %0 {offsets = [0, 128], sizes = [32, 32], strides = [1, 1]} : vector<32x256xf32> to vector<32x32xf32>
    %20 = arith.addf %16, %19 : vector<32x32xf32>
    %21 = arith.mulf %19, %19 : vector<32x32xf32>
    %22 = arith.addf %18, %21 : vector<32x32xf32>
    %23 = vector.extract_strided_slice %0 {offsets = [0, 160], sizes = [32, 32], strides = [1, 1]} : vector<32x256xf32> to vector<32x32xf32>
    %24 = arith.addf %20, %23 : vector<32x32xf32>
    %25 = arith.mulf %23, %23 : vector<32x32xf32>
    %26 = arith.addf %22, %25 : vector<32x32xf32>
    %27 = vector.extract_strided_slice %0 {offsets = [0, 192], sizes = [32, 32], strides = [1, 1]} : vector<32x256xf32> to vector<32x32xf32>
    %28 = arith.addf %24, %27 : vector<32x32xf32>
    %29 = arith.mulf %27, %27 : vector<32x32xf32>
    %30 = arith.addf %26, %29 : vector<32x32xf32>
    %31 = vector.extract_strided_slice %0 {offsets = [0, 224], sizes = [32, 32], strides = [1, 1]} : vector<32x256xf32> to vector<32x32xf32>
    %32 = arith.addf %28, %31 : vector<32x32xf32>
    %33 = arith.mulf %31, %31 : vector<32x32xf32>
    %34 = arith.addf %30, %33 : vector<32x32xf32>
    %35 = arith.mulf %32, %32 : vector<32x32xf32>
    %36 = arith.subf %35, %34 : vector<32x32xf32>
    %cst_2 = arith.constant 5.000000e-01 : f32
    %37 = vector.broadcast %cst_2 : f32 to vector<32x32xf32>
    %38 = arith.mulf %37, %36 : vector<32x32xf32>
    %c0_3 = arith.constant 0 : index
    %c0_4 = arith.constant 0 : index
    %39 = vector.load %arg2[%c0_3, %c0_4] : memref<32x32xf32, #tpu.memory_space<vmem>>, vector<32x32xf32>
    tpu.vector_store %arg2[%c0_3, %c0_4], %38 {strides = array<i32>} : memref<32x32xf32, #tpu.memory_space<vmem>>, vector<32x32xf32>,
    return
  }
  func.func @transform_0(%arg0: i32) -> (i32, i32) {
    %c0_i32 = arith.constant 0 : i32
    %c0_i32_0 = arith.constant 0 : i32
    return %arg0, %c0_i32 : i32, i32
  }
  func.func @transform_1(%arg0: i32) -> (i32, i32) {
    %c0_i32 = arith.constant 0 : i32
    %c0_i32_0 = arith.constant 0 : i32
    return %arg0, %c0_i32 : i32, i32
  }
}

</mosaic_0001>

<llo_original>
// kernel: tpu_custom_call.1
$region0: #{tpu_custom_call.1}
  #allocation0 [shape = 'u32[]', space=smem, size = 0x4, offset = 0x4, fixed_abs, tag = 'smem constant byte address 0x4 - core index']
  #allocation1 [shape = 'u32[144,128]{1,0:T(1,128)}', space=vmem, size = 0x12000, scoped, tag = 'internal scratch']
  %s0 = inlined_call_operand.hbm [shape: f32[64,256], index: 0, kind: input, shape index: {}]
  %s1 = inlined_call_operand.vmem [shape: f32[64,32], index: 1, kind: output, shape index: {}]
  %s2 = sld [smem:[#allocation0]]
  $region41: #{tpu_custom_call.1} parent=0
    _
  %s4 = ssub.s32 1, %s2
  %s5 = scalar_select 0, %s4, %s2
  $region1: #{tpu_custom_call.1} parent=0
    #allocation2 [shape = 'u8[65536]{0}', space=vmem, size = 0x10000, scoped, tag = 'input window, operand 0']
    #allocation3 [shape = 's32[2]{0}', space=sflag, size = 0x8, scoped, tag = 'scoped memory for tpu_custom_call.1']
    %6 = vsyncpa [#allocation3], 0
    %s7 = scalar_lea.sflag [#allocation3], 1
    %8 = vsyncpa %s7, 0
    loop: start=0, step=1, limit=4
    $region2: #{tpu_custom_call.1} parent=1 // loop_pre_header
      _
    $region3: #{tpu_custom_call.1} parent=1 // loop_header
      %s10 = sphi 0, %s14
      %p11 = scmp.ge.s32.totalorder %s10, 4
      %s20 = sphi 0, %s22
      %s23 = sphi 0, %s20
      %s24 = sphi 0, %s23
      %s40 = sphi 0, %s24
      %s46 = sphi 0, %s48
      %s49 = sphi 0, %s46
      %s50 = sphi 0, %s49
      %s66 = sphi 0, %s50
    $region4: #{tpu_custom_call.1} parent=1 // loop_header_branch
      %13 = sbr.rel (%p11) target = $region8
    $region5: #{tpu_custom_call.1} parent=1 // loop_body
      %s15 = ssub.s32 %s10, 1
      %s16 = ssub.s32 %s10, 2
      %s17 = sadd.s32 %s10, 1
      %s18 = ssub.s32 %s10, %s17
      %p19 = scmp.eq.s32.totalorder %s18, 0
      %s21 = sadd.s32 %s20, 1
      %s22 = scalar_select %p19, %s20, %s21
      %p25 = pneg %p19
      %p26 = scmp.eq.s32.totalorder %s10, 1
      %p27 = por %p25, %p26
      %p28 = scmp.ne.s32.totalorder %s20, %s23
      %p29 = scmp.eq.s32.totalorder %s10, 0
      %p30 = por %p28, %p29
      %p31 = scmp.ne.s32.totalorder %s20, %s23
      %p32 = scmp.eq.s32.totalorder %s15, 1
      %p33 = por %p31, %p32
      %p34 = scmp.ne.s32.totalorder %s23, %s24
      %p35 = scmp.eq.s32.totalorder %s15, 0
      %p36 = por %p34, %p35
      %p37 = scmp.ne.s32.totalorder %s23, %s24
      %p38 = scmp.eq.s32.totalorder %s16, 1
      %p39 = por %p37, %p38
      %p41 = scmp.ne.s32.totalorder %s24, %s40
      %p42 = scmp.eq.s32.totalorder %s16, 0
      %p43 = por %p41, %p42
      %s44 = ssub.s32 %s10, %s17
      %p45 = scmp.eq.s32.totalorder %s44, 0
      %s47 = sadd.s32 %s46, 1
      %s48 = scalar_select %p45, %s46, %s47
      %p51 = pneg %p45
      %p52 = scmp.eq.s32.totalorder %s10, 1
      %p53 = por %p51, %p52
      %p54 = scmp.ne.s32.totalorder %s46, %s49
      %p55 = scmp.eq.s32.totalorder %s10, 0
      %p56 = por %p54, %p55
      %p57 = scmp.ne.s32.totalorder %s46, %s49
      %p58 = scmp.eq.s32.totalorder %s15, 1
      %p59 = por %p57, %p58
      %p60 = scmp.ne.s32.totalorder %s49, %s50
      %p61 = scmp.eq.s32.totalorder %s15, 0
      %p62 = por %p60, %p61
      %p63 = scmp.ne.s32.totalorder %s49, %s50
      %p64 = scmp.eq.s32.totalorder %s16, 1
      %p65 = por %p63, %p64
      %p67 = scmp.ne.s32.totalorder %s50, %s66
      %p68 = scmp.eq.s32.totalorder %s16, 0
      %p69 = por %p67, %p68
      %p70 = scmp.le.s32.totalorder 1, %s10
      %p71 = scmp.lt.s32.totalorder %s10, 3
      %p72 = pnand %p70, %p71
      %p73 = pneg %p72
      // Predicated region
      $region9: #{tpu_custom_call.1} parent=5 // pred_check
        _
      $region10: #{tpu_custom_call.1} parent=5 // pred_check_branch
        %75 = sbr.rel (%p72) target = $region12
      $region11: #{tpu_custom_call.1} parent=5 // pred_region
        %s76 = ssub.s32 %s10, 1
      $region12: #{tpu_custom_call.1} parent=5 // pred_fallthru
        _
      %p77 = scmp.lt.s32.totalorder %s10, 2
      // Predicated region
      $region13: #{tpu_custom_call.1} parent=5 // pred_check
        %p78 = pneg %p77
      $region14: #{tpu_custom_call.1} parent=5 // pred_check_branch
        %80 = sbr.rel (%p78) target = $region16
      $region15: #{tpu_custom_call.1} parent=5 // pred_region
        // Predicated region
        $region17: #{tpu_custom_call.1} parent=15 // pred_check
          %p81 = pneg %p30
        $region18: #{tpu_custom_call.1} parent=15 // pred_check_branch
          %83 = sbr.rel (%p81) target = $region20
        $region19: #{tpu_custom_call.1} parent=15 // pred_region
          %s84 = sand.u32 %s20, 1
          %s85 = scalar_lea.sflag [#allocation3], %s84
          %s86 = sand.u32 %s20, 1
          %s87 = smul.addr %s86, 64
          %s88 = scalar_lea.vmem [#allocation2], %s87
          %s89 = smul.u32 4, %s10
          %s91 = ssub.s32 1024, 1024
          %92 = vsyncadd %s85, %s91
          %s93 = smul.addr %s89, 2
          %s94 = smul.addr %s93, 128
          %s95 = scalar_lea.hbm %s0, %s94
          %s96 = sshll.u32 %s88, 4
          %s97 = int_to_ptr.vmem [resolvable:$true] %s96
          %102 = dma.hbm_to_vmem [thread:$0]  %s95, 1024, %s97, %s85, 256, 256, 16
        $region20: #{tpu_custom_call.1} parent=15 // pred_fallthru
          _
      $region16: #{tpu_custom_call.1} parent=5 // pred_fallthru
        _
      %p103 = scmp.le.s32.totalorder 1, %s10
      %p104 = scmp.lt.s32.totalorder %s10, 3
      %p105 = pnand %p103, %p104
      %p106 = pneg %p105
      // Predicated region
      $region21: #{tpu_custom_call.1} parent=5 // pred_check
        _
      $region22: #{tpu_custom_call.1} parent=5 // pred_check_branch
        %108 = sbr.rel (%p105) target = $region24
      $region23: #{tpu_custom_call.1} parent=5 // pred_region
        %s109 = ssub.s32 %s10, 1
        %s110 = sand.u32 %s23, 1
        %s111 = scalar_lea.sflag [#allocation3], %s110
        %s112 = sand.u32 %s23, 1
        %s113 = smul.addr %s112, 64
        %s114 = scalar_lea.vmem [#allocation2], %s113
        // Predicated region
        $region25: #{tpu_custom_call.1} parent=23 // pred_check
          %p115 = pneg %p36
        $region26: #{tpu_custom_call.1} parent=23 // pred_check_branch
          %117 = sbr.rel (%p115) target = $region28
        $region27: #{tpu_custom_call.1} parent=23 // pred_region
          %118 = dma.done %s111, 1024
        $region28: #{tpu_custom_call.1} parent=23 // pred_fallthru
          _
        %s119 = sand.u32 %s23, 1
        %s120 = scalar_lea.sflag [#allocation3], %s119
        %s121 = sand.u32 %s23, 1
        %s122 = smul.addr %s121, 64
        %s123 = scalar_lea.vmem [#allocation2], %s122
        %p124 = pneg %p36
        %p125 = pneg %p33
        %p126 = pneg %p62
        %p127 = pneg %p59
        %s128 = smul.u32 4, %s15
        %p129 = scmp.lt.s32.totalorder %s128, 7
        %s130 = scalar_select %p129, %s128, 7
        %s131 = smul.addr %s130, 8
        %s132 = scalar_lea.vmem %s1, %s131
        %s133 = smul.u32 4, %s15
        %s134 = smul.u32 4, %s15
        %p135 = scmp.lt.s32.totalorder %s134, 7
        %s136 = scalar_select %p135, %s134, 7
        %s137 = smul.addr %s136, 8
        %s138 = scalar_lea.vmem %s1, %s137
        %s139 = smul.u32 4, %s15
        %v140 = vld [vmem:[%s114] sm:$0xff]
        %v141 = vld [vmem:[%s114 + $0x8] sm:$0xff]
        %v142 = vld [vmem:[%s114 + $0x10] sm:$0xff]
        %v143 = vld [vmem:[%s114 + $0x18] sm:$0xff]
        %v144 = vld [vmem:[%s114 + $0x20] sm:$0xff]
        %v145 = vld [vmem:[%s114 + $0x28] sm:$0xff]
        %v146 = vld [vmem:[%s114 + $0x30] sm:$0xff]
        %v147 = vld [vmem:[%s114 + $0x38] sm:$0xff]
        %v148 = vadd.f32 %v140, 0.0
        %v149 = vadd.f32 %v142, 0.0
        %v150 = vadd.f32 %v144, 0.0
        %v151 = vadd.f32 %v146, 0.0
        %v152 = vmul.f32 %v140, %v140
        %v153 = vmul.f32 %v142, %v142
        %v154 = vmul.f32 %v144, %v144
        %v155 = vmul.f32 %v146, %v146
        %v156 = vadd.f32 %v152, 0.0
        %v157 = vadd.f32 %v153, 0.0
        %v158 = vadd.f32 %v154, 0.0
        %v159 = vadd.f32 %v155, 0.0
        %164 = vrot.lane.b32.xlu0 %v140, 96
        %v165 = vpop.permute.xlu0 %164
        %166 = vrot.lane.b32.xlu0 %v142, 96
        %v167 = vpop.permute.xlu0 %166
        %168 = vrot.lane.b32.xlu0 %v144, 96
        %v169 = vpop.permute.xlu0 %168
        %170 = vrot.lane.b32.xlu0 %v146, 96
        %v171 = vpop.permute.xlu0 %170
        %v176 = vadd.f32 %v148, %v165
        %v177 = vadd.f32 %v149, %v167
        %v178 = vadd.f32 %v150, %v169
        %v179 = vadd.f32 %v151, %v171
        %184 = vrot.lane.b32.xlu0 %v152, 96
        %v185 = vpop.permute.xlu0 %184
        %186 = vrot.lane.b32.xlu0 %v153, 96
        %v187 = vpop.permute.xlu0 %186
        %188 = vrot.lane.b32.xlu0 %v154, 96
        %v189 = vpop.permute.xlu0 %188
        %190 = vrot.lane.b32.xlu0 %v155, 96
        %v191 = vpop.permute.xlu0 %190
        %v196 = vadd.f32 %v156, %v185
        %v197 = vadd.f32 %v157, %v187
        %v198 = vadd.f32 %v158, %v189
        %v199 = vadd.f32 %v159, %v191
        %200 = vrot.lane.b32.xlu0 %v140, 64
        %v201 = vpop.permute.xlu0 %200
        %202 = vrot.lane.b32.xlu0 %v142, 64
        %v203 = vpop.permute.xlu0 %202
        %204 = vrot.lane.b32.xlu0 %v144, 64
        %v205 = vpop.permute.xlu0 %204
        %206 = vrot.lane.b32.xlu0 %v146, 64
        %v207 = vpop.permute.xlu0 %206
        %v212 = vadd.f32 %v176, %v201
        %v213 = vadd.f32 %v177, %v203
        %v214 = vadd.f32 %v178, %v205
        %v215 = vadd.f32 %v179, %v207
        %216 = vrot.lane.b32.xlu0 %v152, 64
        %v217 = vpop.permute.xlu0 %216
        %218 = vrot.lane.b32.xlu0 %v153, 64
        %v219 = vpop.permute.xlu0 %218
        %220 = vrot.lane.b32.xlu0 %v154, 64
        %v221 = vpop.permute.xlu0 %220
        %222 = vrot.lane.b32.xlu0 %v155, 64
        %v223 = vpop.permute.xlu0 %222
        %v228 = vadd.f32 %v196, %v217
        %v229 = vadd.f32 %v197, %v219
        %v230 = vadd.f32 %v198, %v221
        %v231 = vadd.f32 %v199, %v223
        %232 = vrot.lane.b32.xlu0 %v140, 32
        %v233 = vpop.permute.xlu0 %232
        %234 = vrot.lane.b32.xlu0 %v142, 32
        %v235 = vpop.permute.xlu0 %234
        %236 = vrot.lane.b32.xlu0 %v144, 32
        %v237 = vpop.permute.xlu0 %236
        %238 = vrot.lane.b32.xlu0 %v146, 32
        %v239 = vpop.permute.xlu0 %238
        %v244 = vadd.f32 %v212, %v233
        %v245 = vadd.f32 %v213, %v235
        %v246 = vadd.f32 %v214, %v237
        %v247 = vadd.f32 %v215, %v239
        %248 = vrot.lane.b32.xlu0 %v152, 32
        %v249 = vpop.permute.xlu0 %248
        %250 = vrot.lane.b32.xlu0 %v153, 32
        %v251 = vpop.permute.xlu0 %250
        %252 = vrot.lane.b32.xlu0 %v154, 32
        %v253 = vpop.permute.xlu0 %252
        %254 = vrot.lane.b32.xlu0 %v155, 32
        %v255 = vpop.permute.xlu0 %254
        %v260 = vadd.f32 %v228, %v249
        %v261 = vadd.f32 %v229, %v251
        %v262 = vadd.f32 %v230, %v253
        %v263 = vadd.f32 %v231, %v255
        %v264 = vadd.f32 %v244, %v141
        %v265 = vadd.f32 %v245, %v143
        %v266 = vadd.f32 %v246, %v145
        %v267 = vadd.f32 %v247, %v147
        %v268 = vmul.f32 %v141, %v141
        %v269 = vmul.f32 %v143, %v143
        %v270 = vmul.f32 %v145, %v145
        %v271 = vmul.f32 %v147, %v147
        %v272 = vadd.f32 %v260, %v268
        %v273 = vadd.f32 %v261, %v269
        %v274 = vadd.f32 %v262, %v270
        %v275 = vadd.f32 %v263, %v271
        %280 = vrot.lane.b32.xlu0 %v141, 96
        %v281 = vpop.permute.xlu0 %280
        %282 = vrot.lane.b32.xlu0 %v143, 96
        %v283 = vpop.permute.xlu0 %282
        %284 = vrot.lane.b32.xlu0 %v145, 96
        %v285 = vpop.permute.xlu0 %284
        %286 = vrot.lane.b32.xlu0 %v147, 96
        %v287 = vpop.permute.xlu0 %286
        %v292 = vadd.f32 %v264, %v281
        %v293 = vadd.f32 %v265, %v283
        %v294 = vadd.f32 %v266, %v285
        %v295 = vadd.f32 %v267, %v287
        %300 = vrot.lane.b32.xlu0 %v268, 96
        %v301 = vpop.permute.xlu0 %300
        %302 = vrot.lane.b32.xlu0 %v269, 96
        %v303 = vpop.permute.xlu0 %302
        %304 = vrot.lane.b32.xlu0 %v270, 96
        %v305 = vpop.permute.xlu0 %304
        %306 = vrot.lane.b32.xlu0 %v271, 96
        %v307 = vpop.permute.xlu0 %306
        %v312 = vadd.f32 %v272, %v301
        %v313 = vadd.f32 %v273, %v303
        %v314 = vadd.f32 %v274, %v305
        %v315 = vadd.f32 %v275, %v307
        %316 = vrot.lane.b32.xlu0 %v141, 64
        %v317 = vpop.permute.xlu0 %316
        %318 = vrot.lane.b32.xlu0 %v143, 64
        %v319 = vpop.permute.xlu0 %318
        %320 = vrot.lane.b32.xlu0 %v145, 64
        %v321 = vpop.permute.xlu0 %320
        %322 = vrot.lane.b32.xlu0 %v147, 64
        %v323 = vpop.permute.xlu0 %322
        %v328 = vadd.f32 %v292, %v317
        %v329 = vadd.f32 %v293, %v319
        %v330 = vadd.f32 %v294, %v321
        %v331 = vadd.f32 %v295, %v323
        %332 = vrot.lane.b32.xlu0 %v268, 64
        %v333 = vpop.permute.xlu0 %332
        %334 = vrot.lane.b32.xlu0 %v269, 64
        %v335 = vpop.permute.xlu0 %334
        %336 = vrot.lane.b32.xlu0 %v270, 64
        %v337 = vpop.permute.xlu0 %336
        %338 = vrot.lane.b32.xlu0 %v271, 64
        %v339 = vpop.permute.xlu0 %338
        %v344 = vadd.f32 %v312, %v333
        %v345 = vadd.f32 %v313, %v335
        %v346 = vadd.f32 %v314, %v337
        %v347 = vadd.f32 %v315, %v339
        %348 = vrot.lane.b32.xlu0 %v141, 32
        %v349 = vpop.permute.xlu0 %348
        %350 = vrot.lane.b32.xlu0 %v143, 32
        %v351 = vpop.permute.xlu0 %350
        %352 = vrot.lane.b32.xlu0 %v145, 32
        %v353 = vpop.permute.xlu0 %352
        %354 = vrot.lane.b32.xlu0 %v147, 32
        %v355 = vpop.permute.xlu0 %354
        %v360 = vadd.f32 %v328, %v349
        %v361 = vadd.f32 %v329, %v351
        %v362 = vadd.f32 %v330, %v353
        %v363 = vadd.f32 %v331, %v355
        %364 = vrot.lane.b32.xlu0 %v268, 32
        %v365 = vpop.permute.xlu0 %364
        %366 = vrot.lane.b32.xlu0 %v269, 32
        %v367 = vpop.permute.xlu0 %366
        %368 = vrot.lane.b32.xlu0 %v270, 32
        %v369 = vpop.permute.xlu0 %368
        %370 = vrot.lane.b32.xlu0 %v271, 32
        %v371 = vpop.permute.xlu0 %370
        %v376 = vadd.f32 %v344, %v365
        %v377 = vadd.f32 %v345, %v367
        %v378 = vadd.f32 %v346, %v369
        %v379 = vadd.f32 %v347, %v371
        %v380 = vmul.f32 %v360, %v360
        %v381 = vmul.f32 %v361, %v361
        %v382 = vmul.f32 %v362, %v362
        %v383 = vmul.f32 %v363, %v363
        %v384 = vsub.f32 %v380, %v376
        %v385 = vsub.f32 %v381, %v377
        %v386 = vsub.f32 %v382, %v378
        %v387 = vsub.f32 %v383, %v379
        %v388 = vmul.f32 %v384, 0.5
        %v389 = vmul.f32 %v385, 0.5
        %v390 = vmul.f32 %v386, 0.5
        %v391 = vmul.f32 %v387, 0.5
        %vm392 = vcmask 261120
        %393 = vst.msk [vmem:[%s138] sm:$0xff] %vm392, %v388
        %394 = vst.msk [vmem:[%s138 + $0x8] sm:$0xff] %vm392, %v389
        %395 = vst.msk [vmem:[%s138 + $0x10] sm:$0xff] %vm392, %v390
        %396 = vst.msk [vmem:[%s138 + $0x18] sm:$0xff] %vm392, %v391
        %s397 = smul.u32 4, %s15
        %p398 = scmp.lt.s32.totalorder %s397, 7
        %s399 = scalar_select %p398, %s397, 7
        %s400 = smul.addr %s399, 8
        %s401 = scalar_lea.vmem %s1, %s400
        // Predicated region
        $region29: #{tpu_custom_call.1} parent=23 // pred_check
          %p402 = pneg %p59
        $region30: #{tpu_custom_call.1} parent=23 // pred_check_branch
          %404 = sbr.rel (%p402) target = $region32
        $region31: #{tpu_custom_call.1} parent=23 // pred_region
          %s405 = smul.u32 4, %s15
        $region32: #{tpu_custom_call.1} parent=23 // pred_fallthru
          _
      $region24: #{tpu_custom_call.1} parent=5 // pred_fallthru
        _
      %p406 = scmp.le.s32.totalorder 2, %s10
      // Predicated region
      $region33: #{tpu_custom_call.1} parent=5 // pred_check
        %p407 = pneg %p406
      $region34: #{tpu_custom_call.1} parent=5 // pred_check_branch
        %409 = sbr.rel (%p407) target = $region36
      $region35: #{tpu_custom_call.1} parent=5 // pred_region
        %s410 = ssub.s32 %s10, 2
        // Predicated region
        $region37: #{tpu_custom_call.1} parent=35 // pred_check
          %p411 = pneg %p65
        $region38: #{tpu_custom_call.1} parent=35 // pred_check_branch
          %413 = sbr.rel (%p411) target = $region40
        $region39: #{tpu_custom_call.1} parent=35 // pred_region
          %s414 = smul.u32 4, %s16
          %p415 = scmp.lt.s32.totalorder %s414, 7
          %s416 = scalar_select %p415, %s414, 7
          %s417 = smul.addr %s416, 8
          %s418 = scalar_lea.vmem %s1, %s417
        $region40: #{tpu_custom_call.1} parent=35 // pred_fallthru
          _
      $region36: #{tpu_custom_call.1} parent=5 // pred_fallthru
        _
    $region6: #{tpu_custom_call.1} parent=1 // loop_footer
      %s14 = sadd.s32 1, %s10
    $region7: #{tpu_custom_call.1} parent=1 // loop_footer_branch
      %9 = sbr.rel target = $region3
    $region8: #{tpu_custom_call.1} parent=1 // loop_exit
      _
    %419 = vsyncpa [#allocation3], 1
    %s420 = scalar_lea.sflag [#allocation3], 1
    %421 = vsyncpa %s420, 1

</llo_original>
